<compile_context>
chip_gen: v5e
topology: v5e:2x2
jax: 0.10.0
libtpu: 0.0.40
codegen_flags: <defaults>
</compile_context>

<pallas_src>
import math
import functools

import jax
import jax.numpy as jnp
from jax.experimental import pallas as pl
from jax.experimental.pallas import tpu as pltpu


_LANES = 128                     # TPU lane width
_TINY_INPUT_BYTES = 64 * 1024    # below this, a fused XLA elementwise op wins


def _build_pe_table(max_len: int, embed_dim: int) -> jnp.ndarray:
    """Deterministic sin/cos positional-encoding table, shape (max_len, embed_dim)."""
    assert embed_dim % 2 == 0, "embed_dim must be even (matches the PyTorch buffer)"
    positions = jnp.arange(max_len, dtype=jnp.float32)[:, None]            # (L, 1)
    denominator = jnp.exp(
        jnp.arange(0, embed_dim, 2, dtype=jnp.float32)
        * (-(math.log(10000.0) / embed_dim))
    )                                                                       # (D/2,)
    angles = positions * denominator                                        # (L, D/2)
    pe = jnp.zeros((max_len, embed_dim), dtype=jnp.float32)
    pe = pe.at[:, 0::2].set(jnp.sin(angles))
    pe = pe.at[:, 1::2].set(jnp.cos(angles))
    return pe


@functools.lru_cache(maxsize=None)
def _vmem_budget():
    """(per-buffer tile bytes, vmem_limit_bytes), gated on the TPU generation."""
    try:
        cap = int(pltpu.get_tpu_info().vmem_capacity_bytes)
    except Exception:
        cap = 64 * 1024 * 1024                       # conservative (v7x-sized)
    if cap >= 100 * 1024 * 1024:                     # v5e / v6e: 128 MiB VMEM
        return 8 * 1024 * 1024, 64 * 1024 * 1024
    return 4 * 1024 * 1024, 48 * 1024 * 1024         # v7x: 64 MiB VMEM


def _choose_row_tile(R: int, max_rows: int) -> int:
    """Largest legal row tile: full extent if it fits, else a multiple-of-8 divisor."""
    if R <= max_rows:
        return R                                     # full extent -> always legal
    top = max_rows - (max_rows % 8)
    for d in range(top, 7, -8):                      # prefer a divisor of R (no masked tail)
        if R % d == 0:
            return d
    return top                                       # masked trailing tile (rare)


def _choose_batch_tile(B: int, R: int, tile_rows: int, max_rows: int) -> int:
    """Block several batches per step when the whole R fits in one tile."""
    if B == 1 or tile_rows != R:
        return 1
    cap = min(B, max(1, max_rows // R))
    for d in range(cap, 0, -1):                      # largest divisor of B <= cap
        if B % d == 0:
            return d
    return 1


def _relpos_kernel(x_ref, pe_ref, o_ref, *, xscale):
    # x_ref / o_ref: (tile_b, tile_rows, 128); pe_ref: (tile_rows, 128).
    x = x_ref[...].astype(jnp.float32)
    pe = pe_ref[...].astype(jnp.float32)
    o_ref[...] = (x * xscale + pe[None, :, :]).astype(o_ref.dtype)


def _call_tiled(x3: jnp.ndarray, pe2: jnp.ndarray, xscale: float) -> jnp.ndarray:
    """x3: (B, R, 128); pe2: (R, 128). out = x3*xscale + pe2 (pe broadcast over B)."""
    B, R, C = x3.shape
    assert pe2.shape == (R, C)

    x_itemsize = jnp.dtype(x3.dtype).itemsize
    pe_itemsize = jnp.dtype(pe2.dtype).itemsize
    tile_bytes, vmem_limit = _vmem_budget()
    max_rows = max(8, (tile_bytes // (C * x_itemsize)) // 8 * 8)

    tile_rows = _choose_row_tile(R, max_rows)
    tile_b = _choose_batch_tile(B, R, tile_rows, max_rows)
    n_row_tiles = pl.cdiv(R, tile_rows)
    n_batch_tiles = pl.cdiv(B, tile_b)

    kernel = functools.partial(_relpos_kernel, xscale=xscale)

    cost = pl.CostEstimate(
        flops=2 * B * R * C,
        transcendentals=0,
        bytes_accessed=(2 * B * x_itemsize + pe_itemsize) * R * C,
    )

    return pl.pallas_call(
        kernel,
        out_shape=jax.ShapeDtypeStruct((B, R, C), x3.dtype),
        grid_spec=pltpu.PrefetchScalarGridSpec(
            num_scalar_prefetch=0,
            # Batch is the innermost (fastest-varying) grid axis: the pe block
            # index depends only on the row-tile index, so its DMA is skipped
            # across all batch iterations (pe stays VMEM-resident).
            grid=(n_row_tiles, n_batch_tiles),
            in_specs=[
                pl.BlockSpec((tile_b, tile_rows, C), lambda r, b: (b, r, 0)),   # x
                pl.BlockSpec((tile_rows, C), lambda r, b: (r, 0)),              # pe (shared)
            ],
            out_specs=pl.BlockSpec((tile_b, tile_rows, C), lambda r, b: (b, r, 0)),
        ),
        compiler_params=pltpu.CompilerParams(
            dimension_semantics=("parallel", "parallel"),
            vmem_limit_bytes=vmem_limit,
            # Fold the static-offset slice / reshape of pe into the input DMA
            # (removes the wrapper-side (T, D) materialization pass).
            allow_input_fusion=[False, True],
        ),
        cost_estimate=cost,
    )(x3, pe2)


def rel_positional_encoding(x: jnp.ndarray,
                            pe_table: jnp.ndarray,
                            offset: int = 0,
                            *,
                            min_pallas_bytes: int = _TINY_INPUT_BYTES) -> jnp.ndarray:
    """x: (B, T, D); pe_table: (max_len, D). Returns x*sqrt(D) + pe[offset:offset+T]."""
    B, T, D = x.shape
    max_len = pe_table.shape[0]
    # Faithful to the PyTorch module's assert (strict '<').
    assert offset + T < max_len, "offset + seq_len must be < max_len"

    xscale = float(math.sqrt(D))   # self.xscale in the PyTorch module

    # Static window (offset is a Python int). With allow_input_fusion the
    # slice/reshape is folded into the pallas_call input DMA.
    pe = jax.lax.slice(pe_table, (offset, 0), (offset + T, D))              # (T, D)

    # Decode-style tiny inputs: kernel launch + pipeline prologue dominate;
    # a fused XLA elementwise op is cheaper than any grid.
    if x.size * jnp.dtype(x.dtype).itemsize < min_pallas_bytes:
        out = x.astype(jnp.float32) * xscale + pe[None, :, :].astype(jnp.float32)
        return out.astype(x.dtype)

    flat = T * D
    if flat % _LANES == 0:
        # Lane-dense view: last dim exactly 128 -> unmasked full-lane stores.
        R = flat // _LANES
        out = _call_tiled(x.reshape(B, R, _LANES), pe.reshape(R, _LANES), xscale)
        return out.reshape(B, T, D)

    # Ragged T*D: pad up to lane-dense, run the same kernel, slice back.
    Rp = pl.cdiv(flat, _LANES)
    pad = Rp * _LANES - flat
    xf = jnp.pad(x.reshape(B, flat), ((0, 0), (0, pad)))
    pef = jnp.pad(pe.reshape(flat), (0, pad))
    out = _call_tiled(xf.reshape(B, Rp, _LANES), pef.reshape(Rp, _LANES), xscale)
    return out.reshape(B, Rp * _LANES)[:, :flat].reshape(B, T, D)


def rel_positional_encoding_ref(x, pe_table, offset=0):
    """Pure-JAX reference (mirrors the PyTorch forward with dropout p=0)."""
    B, T, D = x.shape
    xscale = math.sqrt(D)
    pos_emb = pe_table[offset:offset + T]                                   # (T, D)
    out = x.astype(jnp.float32) * xscale + pos_emb[None, :, :].astype(jnp.float32)
    return out.astype(x.dtype)


if __name__ == "__main__":
    key = jax.random.PRNGKey(0)
    k1, k2, k3 = jax.random.split(key, 3)

    # 1) Main lane-dense Pallas path (f32).
    B, T, D, offset = 2, 128, 128, 3
    max_len = 512          # small stand-in for max_len=50000; same construction
    pe_table = _build_pe_table(max_len, D)
    x = jax.random.normal(k1, (B, T, D), dtype=jnp.float32)
    out = jax.block_until_ready(rel_positional_encoding(x, pe_table, offset=offset))
    ref = rel_positional_encoding_ref(x, pe_table, offset=offset)
    assert out.shape == (B, T, D)
    assert jnp.allclose(out, ref, atol=1e-5, rtol=1e-5)

    # 2) bf16 I/O path (halves HBM bytes; same kernel, f32 accumulation).
    xb = x.astype(jnp.bfloat16)
    outb = jax.block_until_ready(rel_positional_encoding(xb, pe_table, offset=offset))
    refb = rel_positional_encoding_ref(xb, pe_table, offset=offset)
    assert jnp.allclose(outb.astype(jnp.float32), refb.astype(jnp.float32),
                        atol=5e-2, rtol=5e-2)

    # 3) Ragged T*D (not a multiple of 128): padded lane-dense fallback (force Pallas).
    Br, Tr, Dr = 2, 7, 90
    pe_small = _build_pe_table(64, Dr)
    xr = jax.random.normal(k2, (Br, Tr, Dr), dtype=jnp.float32)
    outr = jax.block_until_ready(
        rel_positional_encoding(xr, pe_small, offset=1, min_pallas_bytes=0))
    refr = rel_positional_encoding_ref(xr, pe_small, offset=1)
    assert jnp.allclose(outr, refr, atol=1e-5, rtol=1e-5)

    # 4) Decode-style tiny input: fused XLA bypass.
    xt = jax.random.normal(k3, (1, 8, 32), dtype=jnp.float32)
    pe_tiny = _build_pe_table(64, 32)
    outt = jax.block_until_ready(rel_positional_encoding(xt, pe_tiny, offset=0))
    reft = rel_positional_encoding_ref(xt, pe_tiny, offset=0)
    assert jnp.allclose(outt, reft, atol=1e-5, rtol=1e-5)

    print("KERNEL_OK")
</pallas_src>

<mosaic_0001>
module attributes {stable_mosaic.version = 11 : i64} {
  func.func @_relpos_kernel(%arg0: i32, %arg1: i32, %arg2: memref<2x128x128xf32, #tpu.memory_space<vmem>>, %arg3: memref<128x128xf32, #tpu.memory_space<vmem>>, %arg4: memref<2x128x128xf32, #tpu.memory_space<vmem>>) attributes {dimension_semantics = [#tpu.dimension_semantics<parallel>, #tpu.dimension_semantics<parallel>], iteration_bounds = array<i64: 1, 1>, scalar_prefetch = 0 : i64, scratch_operands = 0 : i64, tpu.core_type = #tpu.core_type<tc>, window_params = [{transform_indices = @transform_0, window_bounds = array<i64: 2, 128, 128>}, {transform_indices = @transform_1, window_bounds = array<i64: 128, 128>}, {transform_indices = @transform_2, window_bounds = array<i64: 2, 128, 128>}]} {
    %c0 = arith.constant 0 : index
    %c0_0 = arith.constant 0 : index
    %c0_1 = arith.constant 0 : index
    %0 = vector.load %arg2[%c0, %c0_0, %c0_1] : memref<2x128x128xf32, #tpu.memory_space<vmem>>, vector<2x128x128xf32>
    %c0_2 = arith.constant 0 : index
    %c0_3 = arith.constant 0 : index
    %1 = vector.load %arg3[%c0_2, %c0_3] : memref<128x128xf32, #tpu.memory_space<vmem>>, vector<128x128xf32>
    %cst = arith.constant 11.3137083 : f32
    %2 = vector.broadcast %cst : f32 to vector<2x128x128xf32>
    %3 = arith.mulf %0, %2 : vector<2x128x128xf32>
    %4 = vector.shape_cast %1 : vector<128x128xf32> to vector<1x128x128xf32>
    %5 = vector.broadcast %4 : vector<1x128x128xf32> to vector<2x128x128xf32>
    %6 = arith.addf %3, %5 : vector<2x128x128xf32>
    %c0_4 = arith.constant 0 : index
    %c0_5 = arith.constant 0 : index
    %c0_6 = arith.constant 0 : index
    %7 = vector.load %arg4[%c0_4, %c0_5, %c0_6] : memref<2x128x128xf32, #tpu.memory_space<vmem>>, vector<2x128x128xf32>
    tpu.vector_store %arg4[%c0_4, %c0_5, %c0_6], %6 {strides = array<i32>} : memref<2x128x128xf32, #tpu.memory_space<vmem>>, vector<2x128x128xf32>,
    return
  }
  func.func @transform_0(%arg0: i32, %arg1: i32) -> (i32, i32, i32) {
    %c0_i32 = arith.constant 0 : i32
    %c0_i32_0 = arith.constant 0 : i32
    return %arg1, %arg0, %c0_i32 : i32, i32, i32
  }
  func.func @transform_1(%arg0: i32, %arg1: i32) -> (i32, i32) {
    %c0_i32 = arith.constant 0 : i32
    %c0_i32_0 = arith.constant 0 : i32
    return %arg0, %c0_i32 : i32, i32
  }
  func.func @transform_2(%arg0: i32, %arg1: i32) -> (i32, i32, i32) {
    %c0_i32 = arith.constant 0 : i32
    %c0_i32_0 = arith.constant 0 : i32
    return %arg1, %arg0, %c0_i32 : i32, i32, i32
  }
}

</mosaic_0001>

<llo_original>
// kernel: tpu_custom_call.1
$region0: #{tpu_custom_call.1}
  #allocation0 [shape = 'u32[]', space=smem, size = 0x4, offset = 0x4, fixed_abs, tag = 'smem constant byte address 0x4 - core index']
  #allocation1 [shape = 'u32[72,128]{1,0:T(1,128)}', space=vmem, size = 0x9000, scoped, tag = 'internal scratch']
  %s0 = inlined_call_operand.hbm [shape: f32[2,128,128], index: 0, kind: input, shape index: {}]
  %s1 = inlined_call_operand.hbm [shape: f32[128,128], index: 1, kind: input, shape index: {}]
  %s2 = inlined_call_operand.hbm [shape: f32[2,128,128], index: 2, kind: output, shape index: {}]
  %s3 = sld [smem:[#allocation0]]
  $region26: #{tpu_custom_call.1} parent=0
    _
  %s5 = ssub.s32 1, %s3
  %s6 = scalar_select 0, %s5, %s3
  $region1: #{tpu_custom_call.1} parent=0
    #allocation2 [shape = 'u8[131072]{0}', space=vmem, size = 0x20000, scoped, tag = 'input window, operand 0, single buffered']
    #allocation3 [shape = 's32[1]{0}', space=sflag, size = 0x4, scoped, tag = 'scoped memory for tpu_custom_call.1']
    #allocation4 [shape = 's32[1]{0}', space=sflag, size = 0x4, scoped, tag = 'scoped memory for tpu_custom_call.1']
    #allocation5 [shape = 'u8[65536]{0}', space=vmem, size = 0x10000, scoped, tag = 'input window, operand 1, single buffered']
    #allocation6 [shape = 's32[1]{0}', space=sflag, size = 0x4, scoped, tag = 'scoped memory for tpu_custom_call.1']
    #allocation7 [shape = 'u8[131072]{0}', space=vmem, size = 0x20000, scoped, tag = 'output window, operand 0, single buffered']
    %7 = vsyncpa [#allocation3], 0
    %8 = vsyncpa [#allocation6], 0
    %9 = vsyncpa [#allocation4], 0
    // Predicated region
    $region2: #{tpu_custom_call.1} parent=1 // pred_check
      _
    $region3: #{tpu_custom_call.1} parent=1 // pred_check_branch
      %11 = sbr.rel (0) target = $region5
    $region4: #{tpu_custom_call.1} parent=1 // pred_region
      %13 = vsyncadd [#allocation3], 0
      %s14 = sshll.u32 %s0, 4
      %s15 = int_to_ptr.hbm [resolvable:$true] %s14
      %s16 = sshll.u32 [#allocation2], 4
      %s17 = int_to_ptr.vmem [resolvable:$true] %s16
      %22 = dma.hbm_to_vmem [thread:$0]  %s15, 4096, %s17, [#allocation3], 128, 128, 8
    $region5: #{tpu_custom_call.1} parent=1 // pred_fallthru
      _
    // Predicated region
    $region6: #{tpu_custom_call.1} parent=1 // pred_check
      _
    $region7: #{tpu_custom_call.1} parent=1 // pred_check_branch
      %24 = sbr.rel (0) target = $region9
    $region8: #{tpu_custom_call.1} parent=1 // pred_region
      %26 = vsyncadd [#allocation6], 0
      %s27 = sshll.u32 %s1, 4
      %s28 = int_to_ptr.hbm [resolvable:$true] %s27
      %s29 = sshll.u32 [#allocation5], 4
      %s30 = int_to_ptr.vmem [resolvable:$true] %s29
      %35 = dma.hbm_to_vmem [thread:$0]  %s28, 2048, %s30, [#allocation6], 128, 128, 8
    $region9: #{tpu_custom_call.1} parent=1 // pred_fallthru
      _
    // Predicated region
    $region10: #{tpu_custom_call.1} parent=1 // pred_check
      _
    $region11: #{tpu_custom_call.1} parent=1 // pred_check_branch
      %37 = sbr.rel (0) target = $region13
    $region12: #{tpu_custom_call.1} parent=1 // pred_region
      %39 = dma.done [#allocation3], 4096
    $region13: #{tpu_custom_call.1} parent=1 // pred_fallthru
      _
    // Predicated region
    $region14: #{tpu_custom_call.1} parent=1 // pred_check
      _
    $region15: #{tpu_custom_call.1} parent=1 // pred_check_branch
      %41 = sbr.rel (0) target = $region17
    $region16: #{tpu_custom_call.1} parent=1 // pred_region
      %43 = dma.done [#allocation6], 2048
    $region17: #{tpu_custom_call.1} parent=1 // pred_fallthru
      _
    %v44 = vld [vmem:[#allocation2] sm:$0xff]
    %v45 = vld [vmem:[#allocation2 + $0x8] sm:$0xff]
    %v46 = vld [vmem:[#allocation2 + $0x10] sm:$0xff]
    %v47 = vld [vmem:[#allocation2 + $0x18] sm:$0xff]
    %v48 = vld [vmem:[#allocation2 + $0x20] sm:$0xff]
    %v49 = vld [vmem:[#allocation2 + $0x28] sm:$0xff]
    %v50 = vld [vmem:[#allocation2 + $0x30] sm:$0xff]
    %v51 = vld [vmem:[#allocation2 + $0x38] sm:$0xff]
    %v52 = vld [vmem:[#allocation2 + $0x40] sm:$0xff]
    %v53 = vld [vmem:[#allocation2 + $0x48] sm:$0xff]
    %v54 = vld [vmem:[#allocation2 + $0x50] sm:$0xff]
    %v55 = vld [vmem:[#allocation2 + $0x58] sm:$0xff]
    %v56 = vld [vmem:[#allocation2 + $0x60] sm:$0xff]
    %v57 = vld [vmem:[#allocation2 + $0x68] sm:$0xff]
    %v58 = vld [vmem:[#allocation2 + $0x70] sm:$0xff]
    %v59 = vld [vmem:[#allocation2 + $0x78] sm:$0xff]
    %v60 = vld [vmem:[#allocation2 + $0x80] sm:$0xff]
    %v61 = vld [vmem:[#allocation2 + $0x88] sm:$0xff]
    %v62 = vld [vmem:[#allocation2 + $0x90] sm:$0xff]
    %v63 = vld [vmem:[#allocation2 + $0x98] sm:$0xff]
    %v64 = vld [vmem:[#allocation2 + $0xa0] sm:$0xff]
    %v65 = vld [vmem:[#allocation2 + $0xa8] sm:$0xff]
    %v66 = vld [vmem:[#allocation2 + $0xb0] sm:$0xff]
    %v67 = vld [vmem:[#allocation2 + $0xb8] sm:$0xff]
    %v68 = vld [vmem:[#allocation2 + $0xc0] sm:$0xff]
    %v69 = vld [vmem:[#allocation2 + $0xc8] sm:$0xff]
    %v70 = vld [vmem:[#allocation2 + $0xd0] sm:$0xff]
    %v71 = vld [vmem:[#allocation2 + $0xd8] sm:$0xff]
    %v72 = vld [vmem:[#allocation2 + $0xe0] sm:$0xff]
    %v73 = vld [vmem:[#allocation2 + $0xe8] sm:$0xff]
    %v74 = vld [vmem:[#allocation2 + $0xf0] sm:$0xff]
    %v75 = vld [vmem:[#allocation2 + $0xf8] sm:$0xff]
    %v76 = vld [vmem:[#allocation5] sm:$0xff]
    %v77 = vld [vmem:[#allocation5 + $0x8] sm:$0xff]
    %v78 = vld [vmem:[#allocation5 + $0x10] sm:$0xff]
    %v79 = vld [vmem:[#allocation5 + $0x18] sm:$0xff]
    %v80 = vld [vmem:[#allocation5 + $0x20] sm:$0xff]
    %v81 = vld [vmem:[#allocation5 + $0x28] sm:$0xff]
    %v82 = vld [vmem:[#allocation5 + $0x30] sm:$0xff]
    %v83 = vld [vmem:[#allocation5 + $0x38] sm:$0xff]
    %v84 = vld [vmem:[#allocation5 + $0x40] sm:$0xff]
    %v85 = vld [vmem:[#allocation5 + $0x48] sm:$0xff]
    %v86 = vld [vmem:[#allocation5 + $0x50] sm:$0xff]
    %v87 = vld [vmem:[#allocation5 + $0x58] sm:$0xff]
    %v88 = vld [vmem:[#allocation5 + $0x60] sm:$0xff]
    %v89 = vld [vmem:[#allocation5 + $0x68] sm:$0xff]
    %v90 = vld [vmem:[#allocation5 + $0x70] sm:$0xff]
    %v91 = vld [vmem:[#allocation5 + $0x78] sm:$0xff]
    %v92 = vmul.f32 %v44, 11.313708
    %v93 = vmul.f32 %v45, 11.313708
    %v94 = vmul.f32 %v46, 11.313708
    %v95 = vmul.f32 %v47, 11.313708
    %v96 = vmul.f32 %v48, 11.313708
    %v97 = vmul.f32 %v49, 11.313708
    %v98 = vmul.f32 %v50, 11.313708
    %v99 = vmul.f32 %v51, 11.313708
    %v100 = vmul.f32 %v52, 11.313708
    %v101 = vmul.f32 %v53, 11.313708
    %v102 = vmul.f32 %v54, 11.313708
    %v103 = vmul.f32 %v55, 11.313708
    %v104 = vmul.f32 %v56, 11.313708
    %v105 = vmul.f32 %v57, 11.313708
    %v106 = vmul.f32 %v58, 11.313708
    %v107 = vmul.f32 %v59, 11.313708
    %v108 = vmul.f32 %v60, 11.313708
    %v109 = vmul.f32 %v61, 11.313708
    %v110 = vmul.f32 %v62, 11.313708
    %v111 = vmul.f32 %v63, 11.313708
    %v112 = vmul.f32 %v64, 11.313708
    %v113 = vmul.f32 %v65, 11.313708
    %v114 = vmul.f32 %v66, 11.313708
    %v115 = vmul.f32 %v67, 11.313708
    %v116 = vmul.f32 %v68, 11.313708
    %v117 = vmul.f32 %v69, 11.313708
    %v118 = vmul.f32 %v70, 11.313708
    %v119 = vmul.f32 %v71, 11.313708
    %v120 = vmul.f32 %v72, 11.313708
    %v121 = vmul.f32 %v73, 11.313708
    %v122 = vmul.f32 %v74, 11.313708
    %v123 = vmul.f32 %v75, 11.313708
    %v124 = vadd.f32 %v92, %v76
    %v125 = vadd.f32 %v93, %v77
    %v126 = vadd.f32 %v94, %v78
    %v127 = vadd.f32 %v95, %v79
    %v128 = vadd.f32 %v96, %v80
    %v129 = vadd.f32 %v97, %v81
    %v130 = vadd.f32 %v98, %v82
    %v131 = vadd.f32 %v99, %v83
    %v132 = vadd.f32 %v100, %v84
    %v133 = vadd.f32 %v101, %v85
    %v134 = vadd.f32 %v102, %v86
    %v135 = vadd.f32 %v103, %v87
    %v136 = vadd.f32 %v104, %v88
    %v137 = vadd.f32 %v105, %v89
    %v138 = vadd.f32 %v106, %v90
    %v139 = vadd.f32 %v107, %v91
    %v140 = vadd.f32 %v108, %v76
    %v141 = vadd.f32 %v109, %v77
    %v142 = vadd.f32 %v110, %v78
    %v143 = vadd.f32 %v111, %v79
    %v144 = vadd.f32 %v112, %v80
    %v145 = vadd.f32 %v113, %v81
    %v146 = vadd.f32 %v114, %v82
    %v147 = vadd.f32 %v115, %v83
    %v148 = vadd.f32 %v116, %v84
    %v149 = vadd.f32 %v117, %v85
    %v150 = vadd.f32 %v118, %v86
    %v151 = vadd.f32 %v119, %v87
    %v152 = vadd.f32 %v120, %v88
    %v153 = vadd.f32 %v121, %v89
    %v154 = vadd.f32 %v122, %v90
    %v155 = vadd.f32 %v123, %v91
    %156 = vst [vmem:[#allocation7] sm:$0xff] %v124
    %157 = vst [vmem:[#allocation7 + $0x8] sm:$0xff] %v125
    %158 = vst [vmem:[#allocation7 + $0x10] sm:$0xff] %v126
    %159 = vst [vmem:[#allocation7 + $0x18] sm:$0xff] %v127
    %160 = vst [vmem:[#allocation7 + $0x20] sm:$0xff] %v128
    %161 = vst [vmem:[#allocation7 + $0x28] sm:$0xff] %v129
    %162 = vst [vmem:[#allocation7 + $0x30] sm:$0xff] %v130
    %163 = vst [vmem:[#allocation7 + $0x38] sm:$0xff] %v131
    %164 = vst [vmem:[#allocation7 + $0x40] sm:$0xff] %v132
    %165 = vst [vmem:[#allocation7 + $0x48] sm:$0xff] %v133
    %166 = vst [vmem:[#allocation7 + $0x50] sm:$0xff] %v134
    %167 = vst [vmem:[#allocation7 + $0x58] sm:$0xff] %v135
    %168 = vst [vmem:[#allocation7 + $0x60] sm:$0xff] %v136
    %169 = vst [vmem:[#allocation7 + $0x68] sm:$0xff] %v137
    %170 = vst [vmem:[#allocation7 + $0x70] sm:$0xff] %v138
    %171 = vst [vmem:[#allocation7 + $0x78] sm:$0xff] %v139
    %172 = vst [vmem:[#allocation7 + $0x80] sm:$0xff] %v140
    %173 = vst [vmem:[#allocation7 + $0x88] sm:$0xff] %v141
    %174 = vst [vmem:[#allocation7 + $0x90] sm:$0xff] %v142
    %175 = vst [vmem:[#allocation7 + $0x98] sm:$0xff] %v143
    %176 = vst [vmem:[#allocation7 + $0xa0] sm:$0xff] %v144
    %177 = vst [vmem:[#allocation7 + $0xa8] sm:$0xff] %v145
    %178 = vst [vmem:[#allocation7 + $0xb0] sm:$0xff] %v146
    %179 = vst [vmem:[#allocation7 + $0xb8] sm:$0xff] %v147
    %180 = vst [vmem:[#allocation7 + $0xc0] sm:$0xff] %v148
    %181 = vst [vmem:[#allocation7 + $0xc8] sm:$0xff] %v149
    %182 = vst [vmem:[#allocation7 + $0xd0] sm:$0xff] %v150
    %183 = vst [vmem:[#allocation7 + $0xd8] sm:$0xff] %v151
    %184 = vst [vmem:[#allocation7 + $0xe0] sm:$0xff] %v152
    %185 = vst [vmem:[#allocation7 + $0xe8] sm:$0xff] %v153
    %186 = vst [vmem:[#allocation7 + $0xf0] sm:$0xff] %v154
    %187 = vst [vmem:[#allocation7 + $0xf8] sm:$0xff] %v155
    // Predicated region
    $region18: #{tpu_custom_call.1} parent=1 // pred_check
      _
    $region19: #{tpu_custom_call.1} parent=1 // pred_check_branch
      %189 = sbr.rel (0) target = $region21
    $region20: #{tpu_custom_call.1} parent=1 // pred_region
      %191 = vsyncadd [#allocation4], 0
      %s192 = sshll.u32 [#allocation7], 4
      %s193 = int_to_ptr.vmem [resolvable:$true] %s192
      %s194 = sshll.u32 %s2, 4
      %s195 = int_to_ptr.hbm [resolvable:$true] %s194
      %200 = dma.vmem_to_hbm [thread:$0]  %s193, 4096, %s195, [#allocation4], 128, 128, 8
    $region21: #{tpu_custom_call.1} parent=1 // pred_fallthru
      _
    // Predicated region
    $region22: #{tpu_custom_call.1} parent=1 // pred_check
      _
    $region23: #{tpu_custom_call.1} parent=1 // pred_check_branch
      %202 = sbr.rel (0) target = $region25
    $region24: #{tpu_custom_call.1} parent=1 // pred_region
      %204 = dma.done [#allocation4], 4096
    $region25: #{tpu_custom_call.1} parent=1 // pred_fallthru
      _
    %205 = vsyncpa [#allocation3], 1
    %206 = vsyncpa [#allocation6], 1
    %207 = vsyncpa [#allocation4], 1

</llo_original>
